<compile_context>
chip_gen: v7x
topology: tpu7x:2x2x1
jax: 0.10.0
libtpu: 0.0.40
codegen_flags: <defaults>
</compile_context>

<pallas_src>
import functools

import jax
import jax.numpy as jnp
from jax.experimental import pallas as pl
from jax.experimental.pallas import tpu as pltpu


def _round_up(x, m):
    return (x + m - 1) // m * m


def _sublane(dtype):
    """Sublane tile for the dtype (None -> unsupported itemsize, use XLA path)."""
    return {4: 8, 2: 16, 1: 32}.get(jnp.dtype(dtype).itemsize)


# --------------------------------------------------------------------------- #
# Kernels.  Input block is always the lane-dense (Bb, T, N*C) slab.
# --------------------------------------------------------------------------- #
def _relayout_kernel_3d(x_ref, o_ref, *, T, N, C):
    """x_ref: (Bb, T, N*C)  ->  o_ref: (Bb, N, T*C)."""
    Bb = o_ref.shape[0]
    TC = T * C
    for n in range(N):                                  # static unroll (N is small)
        chunk = x_ref[:, :, n * C:(n + 1) * C]          # (Bb, T, C) static lane slice
        o_ref[:, n, :] = chunk.reshape(Bb, TC)          # trailing-dim merge


def _relayout_kernel_2d(x_ref, o_ref, y_ref, *, T, N, C):
    """x_ref: (Bb, T, N*C) -> o_ref: (Bb, N*T*C); rows staged in VMEM scratch y_ref."""
    Bb = o_ref.shape[0]
    TC = T * C
    for n in range(N):
        chunk = x_ref[:, :, n * C:(n + 1) * C]          # (Bb, T, C)
        y_ref[:, n, :] = chunk.reshape(Bb, TC)          # offset-0 store into scratch
    # Single sublane->lane merge, then one unmasked full-width store so the
    # output HBM writeback is fully contiguous.
    o_ref[...] = y_ref[...].reshape(Bb, N * TC)


# --------------------------------------------------------------------------- #
# Wrapper.
# --------------------------------------------------------------------------- #
def reshape_for_ml(x):
    """Pallas equivalent of BaseModel.reshape_for_ml: [B,T,N,C] -> [B*N, T*C]."""
    B, T, N, C = x.shape
    dtype = x.dtype
    itemsize = jnp.dtype(dtype).itemsize
    sub = _sublane(dtype)
    numel = B * T * N * C

    # Guarded fallbacks: unsupported itemsize (e.g. 8-byte), degenerate shapes,
    # or huge N (would force a huge unrolled loop).  Plain XLA is correct here.
    if sub is None or numel == 0 or N > 512:
        return jnp.transpose(x, (0, 2, 1, 3)).reshape(B * N, T * C)

    NC, TC, NTC = N * C, T * C, N * T * C

    # --- generation-aware VMEM budget -------------------------------------
    try:
        vmem_capacity = int(pltpu.get_tpu_info().vmem_capacity_bytes)
    except Exception:
        vmem_capacity = 64 * 1024 * 1024            # conservative (v7x per-core)
    multi_tc = vmem_capacity <= 80 * 1024 * 1024    # v7x: 64 MiB/TC, 2 TCs/chip
    if multi_tc:
        cap = min(40 * 1024 * 1024, vmem_capacity - 16 * 1024 * 1024)
    else:                                           # v5e / v6e: 128 MiB, 1 TC
        cap = min(100 * 1024 * 1024, vmem_capacity - 24 * 1024 * 1024)
    cap = max(cap, 8 * 1024 * 1024)

    # 3-D output rows would be lane-padded / masked-stored when T*C % 128 != 0;
    # in that case prefer the 2-D lane-dense presentation.
    need_dense_2d = TC % 128 != 0

    def lane_ok(d):                 # legality of the 2-D (d, N*T*C) output block
        return d % sub == 0 or d == B

    # Padded VMEM tile footprints (actual bytes, including (sublane,128) pads).
    def in_tile(d):
        return d * _round_up(T, sub) * _round_up(NC, 128) * itemsize

    def out3_tile(d):
        return d * _round_up(N, sub) * _round_up(TC, 128) * itemsize

    def out2_tile(d):
        return _round_up(d, sub) * _round_up(NTC, 128) * itemsize

    def scoped_need(d):             # double-buffered in/out (+ scratch if 2-D path)
        if need_dense_2d and lane_ok(d):
            return 2 * (in_tile(d) + out2_tile(d)) + out3_tile(d)
        return 2 * (in_tile(d) + out3_tile(d))

    def fits(d):                    # 25% headroom for relayout temporaries
        return scoped_need(d) * 5 // 4 <= cap

    divisors = [d for d in range(1, B + 1) if B % d == 0]
    cands = [d for d in divisors if fits(d)] or [1]

    def score(d):
        steps = B // d
        keys = []
        if multi_tc:
            keys.append(steps >= 2)          # shard across both TensorCores
        if need_dense_2d:
            keys.append(lane_ok(d))          # unmasked, contiguous writeback
        if multi_tc:
            keys.append(steps % 2 == 0)      # balanced megacore split
        keys.append(d)                       # then: largest real block per step
        return tuple(keys)

    Bb = max(cands, key=score)
    grid = (B // Bb,)
    use_2d = need_dense_2d and lane_ok(Bb)

    need = scoped_need(Bb)
    vmem_limit = max(16 * 1024 * 1024, min(cap, need + need // 2))
    if vmem_limit < need + need // 8:        # degenerate: even Bb=1 beats the cap
        vmem_limit = min(int(vmem_capacity * 0.9), need + need // 4)

    # Free contiguous reshape -> lane-dense input slab for the DMA pipeline.
    x2 = x.reshape(B, T, NC)
    in_spec = pl.BlockSpec((Bb, T, NC), lambda b: (b, 0, 0))

    if use_2d:
        kernel = functools.partial(_relayout_kernel_2d, T=T, N=N, C=C)
        out_struct = jax.ShapeDtypeStruct((B, NTC), dtype)
        out_spec = pl.BlockSpec((Bb, NTC), lambda b: (b, 0))
        scratch = [pltpu.VMEM((Bb, N, TC), dtype)]
    else:
        kernel = functools.partial(_relayout_kernel_3d, T=T, N=N, C=C)
        out_struct = jax.ShapeDtypeStruct((B, N, TC), dtype)
        out_spec = pl.BlockSpec((Bb, N, TC), lambda b: (b, 0, 0))
        scratch = []

    out = pl.pallas_call(
        kernel,
        out_shape=out_struct,
        grid=grid,
        in_specs=[in_spec],
        out_specs=out_spec,
        scratch_shapes=scratch,
        compiler_params=pltpu.CompilerParams(
            dimension_semantics=("parallel",),
            vmem_limit_bytes=int(vmem_limit),
        ),
        cost_estimate=pl.CostEstimate(
            flops=0, transcendentals=0, bytes_accessed=2 * numel * itemsize),
    )(x2)

    return out.reshape(B * N, TC)            # contiguous -> free metadata reshape


class BaseModelPallas:
    """JAX/Pallas port of BaseModel.  `forward` is abstract, as in PyTorch."""

    def __init__(self, num_nodes, input_dim, output_dim):
        self.num_nodes = num_nodes
        self.input_dim = input_dim
        self.output_dim = output_dim
        # BaseModel.__init__ defines no parameters; nothing to initialize.

    def forward(self, x):
        raise NotImplementedError  # abstract in the reference module

    def reshape_for_ml(self, x):
        return reshape_for_ml(x)


def _reference(x):
    B, T, N, C = x.shape
    return jnp.transpose(x, (0, 2, 1, 3)).reshape(B * N, T * C)


if __name__ == "__main__":
    key = jax.random.PRNGKey(0)
    k1, k2, k3 = jax.random.split(key, 3)

    # Case 1: small f32, T*C = 32 (< 128) — lane-dense 2-D output on single-TC
    # chips, 2-step 3-D path (both TensorCores) on dual-TC chips.
    B, T, N, C = 2, 8, 8, 4
    x1 = jax.random.normal(k1, (B, T, N, C), dtype=jnp.float32)
    model = BaseModelPallas(num_nodes=N, input_dim=C, output_dim=C)
    out1 = jax.block_until_ready(model.reshape_for_ml(x1))
    assert out1.shape == (B * N, T * C), out1.shape
    assert out1.dtype == x1.dtype, out1.dtype
    assert bool(jnp.array_equal(out1, _reference(x1))), "case 1 mismatch"

    # Case 2: odd batch, bf16, T*C = 48 (< 128, unaligned) — exercises the
    # staged 2-D lane-dense output (single-TC) / multi-step 3-D path (dual-TC).
    B2, T2, N2, C2 = 3, 12, 20, 4
    x2 = jax.random.normal(k2, (B2, T2, N2, C2),
                           dtype=jnp.float32).astype(jnp.bfloat16)
    out2 = jax.block_until_ready(reshape_for_ml(x2))
    assert out2.shape == (B2 * N2, T2 * C2), out2.shape
    assert out2.dtype == x2.dtype, out2.dtype
    assert bool(jnp.array_equal(out2, _reference(x2))), "case 2 mismatch"

    # Case 3: T*C = 128 — already lane-dense rows, aligned full-lane stores.
    B3, T3, N3, C3 = 4, 16, 12, 8
    x3 = jax.random.normal(k3, (B3, T3, N3, C3), dtype=jnp.float32)
    out3 = jax.block_until_ready(reshape_for_ml(x3))
    assert out3.shape == (B3 * N3, T3 * C3), out3.shape
    assert out3.dtype == x3.dtype, out3.dtype
    assert bool(jnp.array_equal(out3, _reference(x3))), "case 3 mismatch"

    print("KERNEL_OK")
</pallas_src>

<mosaic_0001>
module attributes {stable_mosaic.version = 11 : i64} {
  func.func @_relayout_kernel_3d(%arg0: i32, %arg1: memref<1x8x32xf32, #tpu.memory_space<vmem>>, %arg2: memref<1x8x32xf32, #tpu.memory_space<vmem>>) attributes {dimension_semantics = [#tpu.dimension_semantics<parallel>], iteration_bounds = array<i64: 2>, scalar_prefetch = 0 : i64, scratch_operands = 0 : i64, tpu.core_type = #tpu.core_type<tc>, window_params = [{transform_indices = @transform_0, window_bounds = array<i64: 1, 8, 32>}, {transform_indices = @transform_1, window_bounds = array<i64: 1, 8, 32>}]} {
    %c0 = arith.constant 0 : index
    %c0_0 = arith.constant 0 : index
    %c0_1 = arith.constant 0 : index
    %0 = vector.load %arg1[%c0, %c0_0, %c0_1] : memref<1x8x32xf32, #tpu.memory_space<vmem>>, vector<1x8x4xf32>
    %1 = vector.shape_cast %0 : vector<1x8x4xf32> to vector<1x32xf32>
    %c0_2 = arith.constant 0 : index
    %c0_3 = arith.constant 0 : index
    %c0_4 = arith.constant 0 : index
    %2 = vector.load %arg2[%c0_2, %c0_3, %c0_4] : memref<1x8x32xf32, #tpu.memory_space<vmem>>, vector<1x1x32xf32>
    %3 = vector.shape_cast %2 : vector<1x1x32xf32> to vector<1x32xf32>
    %4 = vector.shape_cast %1 : vector<1x32xf32> to vector<1x1x32xf32>
    tpu.vector_store %arg2[%c0_2, %c0_3, %c0_4], %4 {strides = array<i32>} : memref<1x8x32xf32, #tpu.memory_space<vmem>>, vector<1x1x32xf32>,
    %c0_5 = arith.constant 0 : index
    %c0_6 = arith.constant 0 : index
    %c4 = arith.constant 4 : index
    %5 = vector.load %arg1[%c0_5, %c0_6, %c4] : memref<1x8x32xf32, #tpu.memory_space<vmem>>, vector<1x8x4xf32>
    %6 = vector.shape_cast %5 : vector<1x8x4xf32> to vector<1x32xf32>
    %c0_7 = arith.constant 0 : index
    %c1 = arith.constant 1 : index
    %c0_8 = arith.constant 0 : index
    %7 = vector.load %arg2[%c0_7, %c1, %c0_8] : memref<1x8x32xf32, #tpu.memory_space<vmem>>, vector<1x1x32xf32>
    %8 = vector.shape_cast %7 : vector<1x1x32xf32> to vector<1x32xf32>
    %9 = vector.shape_cast %6 : vector<1x32xf32> to vector<1x1x32xf32>
    tpu.vector_store %arg2[%c0_7, %c1, %c0_8], %9 {strides = array<i32>} : memref<1x8x32xf32, #tpu.memory_space<vmem>>, vector<1x1x32xf32>,
    %c0_9 = arith.constant 0 : index
    %c0_10 = arith.constant 0 : index
    %c8 = arith.constant 8 : index
    %10 = vector.load %arg1[%c0_9, %c0_10, %c8] : memref<1x8x32xf32, #tpu.memory_space<vmem>>, vector<1x8x4xf32>
    %11 = vector.shape_cast %10 : vector<1x8x4xf32> to vector<1x32xf32>
    %c0_11 = arith.constant 0 : index
    %c2 = arith.constant 2 : index
    %c0_12 = arith.constant 0 : index
    %12 = vector.load %arg2[%c0_11, %c2, %c0_12] : memref<1x8x32xf32, #tpu.memory_space<vmem>>, vector<1x1x32xf32>
    %13 = vector.shape_cast %12 : vector<1x1x32xf32> to vector<1x32xf32>
    %14 = vector.shape_cast %11 : vector<1x32xf32> to vector<1x1x32xf32>
    tpu.vector_store %arg2[%c0_11, %c2, %c0_12], %14 {strides = array<i32>} : memref<1x8x32xf32, #tpu.memory_space<vmem>>, vector<1x1x32xf32>,
    %c0_13 = arith.constant 0 : index
    %c0_14 = arith.constant 0 : index
    %c12 = arith.constant 12 : index
    %15 = vector.load %arg1[%c0_13, %c0_14, %c12] : memref<1x8x32xf32, #tpu.memory_space<vmem>>, vector<1x8x4xf32>
    %16 = vector.shape_cast %15 : vector<1x8x4xf32> to vector<1x32xf32>
    %c0_15 = arith.constant 0 : index
    %c3 = arith.constant 3 : index
    %c0_16 = arith.constant 0 : index
    %17 = vector.load %arg2[%c0_15, %c3, %c0_16] : memref<1x8x32xf32, #tpu.memory_space<vmem>>, vector<1x1x32xf32>
    %18 = vector.shape_cast %17 : vector<1x1x32xf32> to vector<1x32xf32>
    %19 = vector.shape_cast %16 : vector<1x32xf32> to vector<1x1x32xf32>
    tpu.vector_store %arg2[%c0_15, %c3, %c0_16], %19 {strides = array<i32>} : memref<1x8x32xf32, #tpu.memory_space<vmem>>, vector<1x1x32xf32>,
    %c0_17 = arith.constant 0 : index
    %c0_18 = arith.constant 0 : index
    %c16 = arith.constant 16 : index
    %20 = vector.load %arg1[%c0_17, %c0_18, %c16] : memref<1x8x32xf32, #tpu.memory_space<vmem>>, vector<1x8x4xf32>
    %21 = vector.shape_cast %20 : vector<1x8x4xf32> to vector<1x32xf32>
    %c0_19 = arith.constant 0 : index
    %c4_20 = arith.constant 4 : index
    %c0_21 = arith.constant 0 : index
    %22 = vector.load %arg2[%c0_19, %c4_20, %c0_21] : memref<1x8x32xf32, #tpu.memory_space<vmem>>, vector<1x1x32xf32>
    %23 = vector.shape_cast %22 : vector<1x1x32xf32> to vector<1x32xf32>
    %24 = vector.shape_cast %21 : vector<1x32xf32> to vector<1x1x32xf32>
    tpu.vector_store %arg2[%c0_19, %c4_20, %c0_21], %24 {strides = array<i32>} : memref<1x8x32xf32, #tpu.memory_space<vmem>>, vector<1x1x32xf32>,
    %c0_22 = arith.constant 0 : index
    %c0_23 = arith.constant 0 : index
    %c20 = arith.constant 20 : index
    %25 = vector.load %arg1[%c0_22, %c0_23, %c20] : memref<1x8x32xf32, #tpu.memory_space<vmem>>, vector<1x8x4xf32>
    %26 = vector.shape_cast %25 : vector<1x8x4xf32> to vector<1x32xf32>
    %c0_24 = arith.constant 0 : index
    %c5 = arith.constant 5 : index
    %c0_25 = arith.constant 0 : index
    %27 = vector.load %arg2[%c0_24, %c5, %c0_25] : memref<1x8x32xf32, #tpu.memory_space<vmem>>, vector<1x1x32xf32>
    %28 = vector.shape_cast %27 : vector<1x1x32xf32> to vector<1x32xf32>
    %29 = vector.shape_cast %26 : vector<1x32xf32> to vector<1x1x32xf32>
    tpu.vector_store %arg2[%c0_24, %c5, %c0_25], %29 {strides = array<i32>} : memref<1x8x32xf32, #tpu.memory_space<vmem>>, vector<1x1x32xf32>,
    %c0_26 = arith.constant 0 : index
    %c0_27 = arith.constant 0 : index
    %c24 = arith.constant 24 : index
    %30 = vector.load %arg1[%c0_26, %c0_27, %c24] : memref<1x8x32xf32, #tpu.memory_space<vmem>>, vector<1x8x4xf32>
    %31 = vector.shape_cast %30 : vector<1x8x4xf32> to vector<1x32xf32>
    %c0_28 = arith.constant 0 : index
    %c6 = arith.constant 6 : index
    %c0_29 = arith.constant 0 : index
    %32 = vector.load %arg2[%c0_28, %c6, %c0_29] : memref<1x8x32xf32, #tpu.memory_space<vmem>>, vector<1x1x32xf32>
    %33 = vector.shape_cast %32 : vector<1x1x32xf32> to vector<1x32xf32>
    %34 = vector.shape_cast %31 : vector<1x32xf32> to vector<1x1x32xf32>
    tpu.vector_store %arg2[%c0_28, %c6, %c0_29], %34 {strides = array<i32>} : memref<1x8x32xf32, #tpu.memory_space<vmem>>, vector<1x1x32xf32>,
    %c0_30 = arith.constant 0 : index
    %c0_31 = arith.constant 0 : index
    %c28 = arith.constant 28 : index
    %35 = vector.load %arg1[%c0_30, %c0_31, %c28] : memref<1x8x32xf32, #tpu.memory_space<vmem>>, vector<1x8x4xf32>
    %36 = vector.shape_cast %35 : vector<1x8x4xf32> to vector<1x32xf32>
    %c0_32 = arith.constant 0 : index
    %c7 = arith.constant 7 : index
    %c0_33 = arith.constant 0 : index
    %37 = vector.load %arg2[%c0_32, %c7, %c0_33] : memref<1x8x32xf32, #tpu.memory_space<vmem>>, vector<1x1x32xf32>
    %38 = vector.shape_cast %37 : vector<1x1x32xf32> to vector<1x32xf32>
    %39 = vector.shape_cast %36 : vector<1x32xf32> to vector<1x1x32xf32>
    tpu.vector_store %arg2[%c0_32, %c7, %c0_33], %39 {strides = array<i32>} : memref<1x8x32xf32, #tpu.memory_space<vmem>>, vector<1x1x32xf32>,
    return
  }
  func.func @transform_0(%arg0: i32) -> (i32, i32, i32) {
    %c0_i32 = arith.constant 0 : i32
    %c0_i32_0 = arith.constant 0 : i32
    %c0_i32_1 = arith.constant 0 : i32
    return %arg0, %c0_i32, %c0_i32_0 : i32, i32, i32
  }
  func.func @transform_1(%arg0: i32) -> (i32, i32, i32) {
    %c0_i32 = arith.constant 0 : i32
    %c0_i32_0 = arith.constant 0 : i32
    %c0_i32_1 = arith.constant 0 : i32
    return %arg0, %c0_i32, %c0_i32_0 : i32, i32, i32
  }
}

</mosaic_0001>

<llo_original>
// kernel: tpu_custom_call.1
$region0: #{tpu_custom_call.1}
  #allocation0 [shape = 'u32[]', space=smem, size = 0x4, offset = 0x4, fixed_abs, tag = 'smem constant byte address 0x4 - core index']
  #allocation1 [shape = 'u32[144,128]{1,0:T(1,128)}', space=vmem, size = 0x12000, scoped, tag = 'internal scratch']
  %s0 = inlined_call_operand.hbm [shape: f32[2,8,32], index: 0, kind: input, shape index: {}]
  %s1 = inlined_call_operand.hbm [shape: f32[2,8,32], index: 1, kind: output, shape index: {}]
  %s2 = sld [smem:[#allocation0]]
  $region41: #{tpu_custom_call.1} parent=0
    _
  %s4 = ssub.s32 1, %s2
  %s5 = scalar_select 0, %s4, %s2
  $region1: #{tpu_custom_call.1} parent=0
    #allocation2 [shape = 'u8[8192]{0}', space=vmem, size = 0x2000, scoped, tag = 'input window, operand 0']
    #allocation3 [shape = 's32[2]{0}', space=sflag, size = 0x8, scoped, tag = 'scoped memory for tpu_custom_call.1']
    #allocation4 [shape = 's32[2]{0}', space=sflag, size = 0x8, scoped, tag = 'scoped memory for tpu_custom_call.1']
    #allocation5 [shape = 'u8[8192]{0}', space=vmem, size = 0x2000, scoped, tag = 'output window, operand 0']
    %6 = vsyncpa [#allocation3], 0
    %s7 = scalar_lea.sflag [#allocation3], 1
    %8 = vsyncpa %s7, 0
    %9 = vsyncpa [#allocation4], 0
    %s10 = scalar_lea.sflag [#allocation4], 1
    %11 = vsyncpa %s10, 0
    loop: start=0, step=1, limit=4
    $region2: #{tpu_custom_call.1} parent=1 // loop_pre_header
      _
    $region3: #{tpu_custom_call.1} parent=1 // loop_header
      %s13 = sphi 0, %s17
      %p14 = scmp.ge.s32.totalorder %s13, 4
      %s23 = sphi 0, %s25
      %s26 = sphi 0, %s23
      %s27 = sphi 0, %s26
      %s43 = sphi 0, %s27
      %s49 = sphi 0, %s51
      %s52 = sphi 0, %s49
      %s53 = sphi 0, %s52
      %s69 = sphi 0, %s53
    $region4: #{tpu_custom_call.1} parent=1 // loop_header_branch
      %16 = sbr.rel (%p14) target = $region8
    $region5: #{tpu_custom_call.1} parent=1 // loop_body
      %s18 = ssub.s32 %s13, 1
      %s19 = ssub.s32 %s13, 2
      %s20 = sadd.s32 %s13, 1
      %s21 = ssub.s32 %s13, %s20
      %p22 = scmp.eq.s32.totalorder %s21, 0
      %s24 = sadd.s32 %s23, 1
      %s25 = scalar_select %p22, %s23, %s24
      %p28 = pneg %p22
      %p29 = scmp.eq.s32.totalorder %s13, 1
      %p30 = por %p28, %p29
      %p31 = scmp.ne.s32.totalorder %s23, %s26
      %p32 = scmp.eq.s32.totalorder %s13, 0
      %p33 = por %p31, %p32
      %p34 = scmp.ne.s32.totalorder %s23, %s26
      %p35 = scmp.eq.s32.totalorder %s18, 1
      %p36 = por %p34, %p35
      %p37 = scmp.ne.s32.totalorder %s26, %s27
      %p38 = scmp.eq.s32.totalorder %s18, 0
      %p39 = por %p37, %p38
      %p40 = scmp.ne.s32.totalorder %s26, %s27
      %p41 = scmp.eq.s32.totalorder %s19, 1
      %p42 = por %p40, %p41
      %p44 = scmp.ne.s32.totalorder %s27, %s43
      %p45 = scmp.eq.s32.totalorder %s19, 0
      %p46 = por %p44, %p45
      %s47 = ssub.s32 %s13, %s20
      %p48 = scmp.eq.s32.totalorder %s47, 0
      %s50 = sadd.s32 %s49, 1
      %s51 = scalar_select %p48, %s49, %s50
      %p54 = pneg %p48
      %p55 = scmp.eq.s32.totalorder %s13, 1
      %p56 = por %p54, %p55
      %p57 = scmp.ne.s32.totalorder %s49, %s52
      %p58 = scmp.eq.s32.totalorder %s13, 0
      %p59 = por %p57, %p58
      %p60 = scmp.ne.s32.totalorder %s49, %s52
      %p61 = scmp.eq.s32.totalorder %s18, 1
      %p62 = por %p60, %p61
      %p63 = scmp.ne.s32.totalorder %s52, %s53
      %p64 = scmp.eq.s32.totalorder %s18, 0
      %p65 = por %p63, %p64
      %p66 = scmp.ne.s32.totalorder %s52, %s53
      %p67 = scmp.eq.s32.totalorder %s19, 1
      %p68 = por %p66, %p67
      %p70 = scmp.ne.s32.totalorder %s53, %s69
      %p71 = scmp.eq.s32.totalorder %s19, 0
      %p72 = por %p70, %p71
      %p73 = scmp.le.s32.totalorder 1, %s13
      %p74 = scmp.lt.s32.totalorder %s13, 3
      %p75 = pnand %p73, %p74
      %p76 = pneg %p75
      // Predicated region
      $region9: #{tpu_custom_call.1} parent=5 // pred_check
        _
      $region10: #{tpu_custom_call.1} parent=5 // pred_check_branch
        %78 = sbr.rel (%p75) target = $region12
      $region11: #{tpu_custom_call.1} parent=5 // pred_region
        %s79 = ssub.s32 %s13, 1
      $region12: #{tpu_custom_call.1} parent=5 // pred_fallthru
        _
      %p80 = scmp.lt.s32.totalorder %s13, 2
      // Predicated region
      $region13: #{tpu_custom_call.1} parent=5 // pred_check
        %p81 = pneg %p80
      $region14: #{tpu_custom_call.1} parent=5 // pred_check_branch
        %83 = sbr.rel (%p81) target = $region16
      $region15: #{tpu_custom_call.1} parent=5 // pred_region
        // Predicated region
        $region17: #{tpu_custom_call.1} parent=15 // pred_check
          %p84 = pneg %p33
        $region18: #{tpu_custom_call.1} parent=15 // pred_check_branch
          %86 = sbr.rel (%p84) target = $region20
        $region19: #{tpu_custom_call.1} parent=15 // pred_region
          %s87 = sand.u32 %s23, 1
          %s88 = scalar_lea.sflag [#allocation3], %s87
          %s89 = sand.u32 %s23, 1
          %s90 = smul.addr %s89, 8
          %s91 = scalar_lea.vmem [#allocation2], %s90
          %s93 = ssub.s32 128, 128
          %94 = vsyncadd %s88, %s93
          %s95 = smul.addr %s13, 128
          %s96 = scalar_lea.hbm %s0, %s95
          %s98 = sshll.u32 %s91, 4
          %s99 = int_to_ptr.vmem [resolvable:$true] %s98
          %101 = dma.hbm_to_vmem [thread:$0]  %s96, 128, %s99, %s88
        $region20: #{tpu_custom_call.1} parent=15 // pred_fallthru
          _
      $region16: #{tpu_custom_call.1} parent=5 // pred_fallthru
        _
      %p102 = scmp.le.s32.totalorder 1, %s13
      %p103 = scmp.lt.s32.totalorder %s13, 3
      %p104 = pnand %p102, %p103
      %p105 = pneg %p104
      // Predicated region
      $region21: #{tpu_custom_call.1} parent=5 // pred_check
        _
      $region22: #{tpu_custom_call.1} parent=5 // pred_check_branch
        %107 = sbr.rel (%p104) target = $region24
      $region23: #{tpu_custom_call.1} parent=5 // pred_region
        %s108 = ssub.s32 %s13, 1
        %s109 = sand.u32 %s26, 1
        %s110 = scalar_lea.sflag [#allocation3], %s109
        %s111 = sand.u32 %s26, 1
        %s112 = smul.addr %s111, 8
        %s113 = scalar_lea.vmem [#allocation2], %s112
        // Predicated region
        $region25: #{tpu_custom_call.1} parent=23 // pred_check
          %p114 = pneg %p39
        $region26: #{tpu_custom_call.1} parent=23 // pred_check_branch
          %116 = sbr.rel (%p114) target = $region28
        $region27: #{tpu_custom_call.1} parent=23 // pred_region
          %117 = dma.done %s110, 128
        $region28: #{tpu_custom_call.1} parent=23 // pred_fallthru
          _
        %s118 = sand.u32 %s26, 1
        %s119 = scalar_lea.sflag [#allocation3], %s118
        %s120 = sand.u32 %s26, 1
        %s121 = smul.addr %s120, 8
        %s122 = scalar_lea.vmem [#allocation2], %s121
        %p123 = pneg %p39
        %p124 = pneg %p36
        %p125 = pneg %p65
        %p126 = pneg %p62
        %s127 = sand.u32 %s52, 1
        %s128 = scalar_lea.sflag [#allocation4], %s127
        %s129 = sand.u32 %s52, 1
        %s130 = smul.addr %s129, 8
        %s131 = scalar_lea.vmem [#allocation5], %s130
        %v132 = vld [vmem:[%s113] sm:$0xff]
        %v133 = vcombine.high %v132, 0.0
        %v135 = vunpack.c.l.s4 1983009808
        %v136 = vunpack.c.0.s8 %v135
        %v137 = vlaneseq
        %v138 = vshrl.u32 %v137, 7
        %v139 = vsub.s32 %v136, %v138
        %v140 = vrot.slane %v132, %v139
        %v142 = vunpack.c.l.s4 1983009808
        %v143 = vunpack.c.0.s8 %v142
        %v144 = vlaneseq
        %v145 = vshrl.u32 %v144, 7
        %v146 = vsub.s32 %v143, %v145
        %v147 = vrot.slane %v133, %v146
        %v148 = vcombine.high %v140, 0.0
        %v150 = vunpack.c.l.s4 1934713408
        %v151 = vunpack.c.0.s8 %v150
        %v152 = vlaneseq
        %v153 = vshrl.u32 %v152, 7
        %v154 = vsub.s32 %v151, %v153
        %v155 = vrot.slane %v140, %v154
        %v157 = vunpack.c.l.s4 1934713408
        %v158 = vunpack.c.0.s8 %v157
        %v159 = vlaneseq
        %v160 = vshrl.u32 %v159, 7
        %v161 = vsub.s32 %v158, %v160
        %v162 = vrot.slane %v148, %v161
        %v163 = vcombine.high %v147, 0.0
        %v165 = vunpack.c.l.s4 1934713408
        %v166 = vunpack.c.0.s8 %v165
        %v167 = vlaneseq
        %v168 = vshrl.u32 %v167, 7
        %v169 = vsub.s32 %v166, %v168
        %v170 = vrot.slane %v147, %v169
        %v172 = vunpack.c.l.s4 1934713408
        %v173 = vunpack.c.0.s8 %v172
        %v174 = vlaneseq
        %v175 = vshrl.u32 %v174, 7
        %v176 = vsub.s32 %v173, %v175
        %v177 = vrot.slane %v163, %v176
        %v178 = vcombine.high %v155, 0.0
        %v179 = vcombine.high %v162, 0.0
        %v180 = vcombine.high %v170, 0.0
        %v181 = vcombine.high %v177, 0.0
        %183 = vrot.lane.b32.xlu0 %v178, 4
        %v184 = vpop.permute.xlu0 %183
        %187 = vrot.lane.b32.xlu0 %v162, 8
        %v188 = vpop.permute.xlu0 %187
        %191 = vrot.lane.b32.xlu0 %v179, 12
        %v192 = vpop.permute.xlu0 %191
        %195 = vrot.lane.b32.xlu0 %v170, 16
        %v196 = vpop.permute.xlu0 %195
        %199 = vrot.lane.b32.xlu0 %v180, 20
        %v200 = vpop.permute.xlu0 %199
        %203 = vrot.lane.b32.xlu0 %v177, 24
        %v204 = vpop.permute.xlu0 %203
        %207 = vrot.lane.b32.xlu0 %v181, 28
        %v208 = vpop.permute.xlu0 %207
        %vm210 = vcmask 31744
        %v211 = vsel %vm210, %v155, %v184
        %vm212 = vcmask 64512
        %v213 = vsel %vm212, %v211, %v188
        %vm214 = vcmask 97280
        %v215 = vsel %vm214, %v213, %v192
        %vm216 = vcmask 130048
        %v217 = vsel %vm216, %v215, %v196
        %vm218 = vcmask 162816
        %v219 = vsel %vm218, %v217, %v200
        %vm220 = vcmask 195584
        %v221 = vsel %vm220, %v219, %v204
        %vm222 = vcmask 228352
        %v223 = vsel %vm222, %v221, %v208
        %vm224 = vcmask 253952
        %225 = vst.msk [vmem:[%s131] sm:$0x1] %vm224, %v223
        %v226 = vld [vmem:[%s113] sm:$0xff]
        %228 = vrot.lane.b32.xlu0 %v226, 124
        %v229 = vpop.permute.xlu0 %228
        %v231 = vcombine.high %v229, 0.0
        %v233 = vunpack.c.l.s4 1983009808
        %v234 = vunpack.c.0.s8 %v233
        %v235 = vlaneseq
        %v236 = vshrl.u32 %v235, 7
        %v237 = vsub.s32 %v234, %v236
        %v238 = vrot.slane %v229, %v237
        %v240 = vunpack.c.l.s4 1983009808
        %v241 = vunpack.c.0.s8 %v240
        %v242 = vlaneseq
        %v243 = vshrl.u32 %v242, 7
        %v244 = vsub.s32 %v241, %v243
        %v245 = vrot.slane %v231, %v244
        %v246 = vcombine.high %v238, 0.0
        %v248 = vunpack.c.l.s4 1934713408
        %v249 = vunpack.c.0.s8 %v248
        %v250 = vlaneseq
        %v251 = vshrl.u32 %v250, 7
        %v252 = vsub.s32 %v249, %v251
        %v253 = vrot.slane %v238, %v252
        %v255 = vunpack.c.l.s4 1934713408
        %v256 = vunpack.c.0.s8 %v255
        %v257 = vlaneseq
        %v258 = vshrl.u32 %v257, 7
        %v259 = vsub.s32 %v256, %v258
        %v260 = vrot.slane %v246, %v259
        %v261 = vcombine.high %v245, 0.0
        %v263 = vunpack.c.l.s4 1934713408
        %v264 = vunpack.c.0.s8 %v263
        %v265 = vlaneseq
        %v266 = vshrl.u32 %v265, 7
        %v267 = vsub.s32 %v264, %v266
        %v268 = vrot.slane %v245, %v267
        %v270 = vunpack.c.l.s4 1934713408
        %v271 = vunpack.c.0.s8 %v270
        %v272 = vlaneseq
        %v273 = vshrl.u32 %v272, 7
        %v274 = vsub.s32 %v271, %v273
        %v275 = vrot.slane %v261, %v274
        %v276 = vcombine.high %v253, 0.0
        %v277 = vcombine.high %v260, 0.0
        %v278 = vcombine.high %v268, 0.0
        %v279 = vcombine.high %v275, 0.0
        %281 = vrot.lane.b32.xlu0 %v276, 4
        %v282 = vpop.permute.xlu0 %281
        %285 = vrot.lane.b32.xlu0 %v260, 8
        %v286 = vpop.permute.xlu0 %285
        %289 = vrot.lane.b32.xlu0 %v277, 12
        %v290 = vpop.permute.xlu0 %289
        %293 = vrot.lane.b32.xlu0 %v268, 16
        %v294 = vpop.permute.xlu0 %293
        %297 = vrot.lane.b32.xlu0 %v278, 20
        %v298 = vpop.permute.xlu0 %297
        %301 = vrot.lane.b32.xlu0 %v275, 24
        %v302 = vpop.permute.xlu0 %301
        %305 = vrot.lane.b32.xlu0 %v279, 28
        %v306 = vpop.permute.xlu0 %305
        %v308 = vsel %vm210, %v253, %v282
        %v309 = vsel %vm212, %v308, %v286
        %v310 = vsel %vm214, %v309, %v290
        %v311 = vsel %vm216, %v310, %v294
        %v312 = vsel %vm218, %v311, %v298
        %v313 = vsel %vm220, %v312, %v302
        %v314 = vsel %vm222, %v313, %v306
        %315 = vst.msk [vmem:[%s131 + $0x1] sm:$0x1] %vm224, %v314
        %v316 = vld [vmem:[%s113] sm:$0xff]
        %318 = vrot.lane.b32.xlu0 %v316, 120
        %v319 = vpop.permute.xlu0 %318
        %v321 = vcombine.high %v319, 0.0
        %v323 = vunpack.c.l.s4 1983009808
        %v324 = vunpack.c.0.s8 %v323
        %v325 = vlaneseq
        %v326 = vshrl.u32 %v325, 7
        %v327 = vsub.s32 %v324, %v326
        %v328 = vrot.slane %v319, %v327
        %v330 = vunpack.c.l.s4 1983009808
        %v331 = vunpack.c.0.s8 %v330
        %v332 = vlaneseq
        %v333 = vshrl.u32 %v332, 7
        %v334 = vsub.s32 %v331, %v333
        %v335 = vrot.slane %v321, %v334
        %v336 = vcombine.high %v328, 0.0
        %v338 = vunpack.c.l.s4 1934713408
        %v339 = vunpack.c.0.s8 %v338
        %v340 = vlaneseq
        %v341 = vshrl.u32 %v340, 7
        %v342 = vsub.s32 %v339, %v341
        %v343 = vrot.slane %v328, %v342
        %v345 = vunpack.c.l.s4 1934713408
        %v346 = vunpack.c.0.s8 %v345
        %v347 = vlaneseq
        %v348 = vshrl.u32 %v347, 7
        %v349 = vsub.s32 %v346, %v348
        %v350 = vrot.slane %v336, %v349
        %v351 = vcombine.high %v335, 0.0
        %v353 = vunpack.c.l.s4 1934713408
        %v354 = vunpack.c.0.s8 %v353
        %v355 = vlaneseq
        %v356 = vshrl.u32 %v355, 7
        %v357 = vsub.s32 %v354, %v356
        %v358 = vrot.slane %v335, %v357
        %v360 = vunpack.c.l.s4 1934713408
        %v361 = vunpack.c.0.s8 %v360
        %v362 = vlaneseq
        %v363 = vshrl.u32 %v362, 7
        %v364 = vsub.s32 %v361, %v363
        %v365 = vrot.slane %v351, %v364
        %v366 = vcombine.high %v343, 0.0
        %v367 = vcombine.high %v350, 0.0
        %v368 = vcombine.high %v358, 0.0
        %v369 = vcombine.high %v365, 0.0
        %371 = vrot.lane.b32.xlu0 %v366, 4
        %v372 = vpop.permute.xlu0 %371
        %375 = vrot.lane.b32.xlu0 %v350, 8
        %v376 = vpop.permute.xlu0 %375
        %379 = vrot.lane.b32.xlu0 %v367, 12
        %v380 = vpop.permute.xlu0 %379
        %383 = vrot.lane.b32.xlu0 %v358, 16
        %v384 = vpop.permute.xlu0 %383
        %387 = vrot.lane.b32.xlu0 %v368, 20
        %v388 = vpop.permute.xlu0 %387
        %391 = vrot.lane.b32.xlu0 %v365, 24
        %v392 = vpop.permute.xlu0 %391
        %395 = vrot.lane.b32.xlu0 %v369, 28
        %v396 = vpop.permute.xlu0 %395
        %v398 = vsel %vm210, %v343, %v372
        %v399 = vsel %vm212, %v398, %v376
        %v400 = vsel %vm214, %v399, %v380
        %v401 = vsel %vm216, %v400, %v384
        %v402 = vsel %vm218, %v401, %v388
        %v403 = vsel %vm220, %v402, %v392
        %v404 = vsel %vm222, %v403, %v396
        %405 = vst.msk [vmem:[%s131 + $0x2] sm:$0x1] %vm224, %v404
        %v406 = vld [vmem:[%s113] sm:$0xff]
        %408 = vrot.lane.b32.xlu0 %v406, 116
        %v409 = vpop.permute.xlu0 %408
        %v411 = vcombine.high %v409, 0.0
        %v413 = vunpack.c.l.s4 1983009808
        %v414 = vunpack.c.0.s8 %v413
        %v415 = vlaneseq
        %v416 = vshrl.u32 %v415, 7
        %v417 = vsub.s32 %v414, %v416
        %v418 = vrot.slane %v409, %v417
        %v420 = vunpack.c.l.s4 1983009808
        %v421 = vunpack.c.0.s8 %v420
        %v422 = vlaneseq
        %v423 = vshrl.u32 %v422, 7
        %v424 = vsub.s32 %v421, %v423
        %v425 = vrot.slane %v411, %v424
        %v426 = vcombine.high %v418, 0.0
        %v428 = vunpack.c.l.s4 1934713408
        %v429 = vunpack.c.0.s8 %v428
        %v430 = vlaneseq
        %v431 = vshrl.u32 %v430, 7
        %v432 = vsub.s32 %v429, %v431
        %v433 = vrot.slane %v418, %v432
        %v435 = vunpack.c.l.s4 1934713408
        %v436 = vunpack.c.0.s8 %v435
        %v437 = vlaneseq
        %v438 = vshrl.u32 %v437, 7
        %v439 = vsub.s32 %v436, %v438
        %v440 = vrot.slane %v426, %v439
        %v441 = vcombine.high %v425, 0.0
        %v443 = vunpack.c.l.s4 1934713408
        %v444 = vunpack.c.0.s8 %v443
        %v445 = vlaneseq
        %v446 = vshrl.u32 %v445, 7
        %v447 = vsub.s32 %v444, %v446
        %v448 = vrot.slane %v425, %v447
        %v450 = vunpack.c.l.s4 1934713408
        %v451 = vunpack.c.0.s8 %v450
        %v452 = vlaneseq
        %v453 = vshrl.u32 %v452, 7
        %v454 = vsub.s32 %v451, %v453
        %v455 = vrot.slane %v441, %v454
        %v456 = vcombine.high %v433, 0.0
        %v457 = vcombine.high %v440, 0.0
        %v458 = vcombine.high %v448, 0.0
        %v459 = vcombine.high %v455, 0.0
        %461 = vrot.lane.b32.xlu0 %v456, 4
        %v462 = vpop.permute.xlu0 %461
        %465 = vrot.lane.b32.xlu0 %v440, 8
        %v466 = vpop.permute.xlu0 %465
        %469 = vrot.lane.b32.xlu0 %v457, 12
        %v470 = vpop.permute.xlu0 %469
        %473 = vrot.lane.b32.xlu0 %v448, 16
        %v474 = vpop.permute.xlu0 %473
        %477 = vrot.lane.b32.xlu0 %v458, 20
        %v478 = vpop.permute.xlu0 %477
        %481 = vrot.lane.b32.xlu0 %v455, 24
        %v482 = vpop.permute.xlu0 %481
        %485 = vrot.lane.b32.xlu0 %v459, 28
        %v486 = vpop.permute.xlu0 %485
        %v488 = vsel %vm210, %v433, %v462
        %v489 = vsel %vm212, %v488, %v466
        %v490 = vsel %vm214, %v489, %v470
        %v491 = vsel %vm216, %v490, %v474
        %v492 = vsel %vm218, %v491, %v478
        %v493 = vsel %vm220, %v492, %v482
        %v494 = vsel %vm222, %v493, %v486
        %495 = vst.msk [vmem:[%s131 + $0x3] sm:$0x1] %vm224, %v494
        %v496 = vld [vmem:[%s113] sm:$0xff]
        %498 = vrot.lane.b32.xlu0 %v496, 112
        %v499 = vpop.permute.xlu0 %498
        %v501 = vcombine.high %v499, 0.0
        %v503 = vunpack.c.l.s4 1983009808
        %v504 = vunpack.c.0.s8 %v503
        %v505 = vlaneseq
        %v506 = vshrl.u32 %v505, 7
        %v507 = vsub.s32 %v504, %v506
        %v508 = vrot.slane %v499, %v507
        %v510 = vunpack.c.l.s4 1983009808
        %v511 = vunpack.c.0.s8 %v510
        %v512 = vlaneseq
        %v513 = vshrl.u32 %v512, 7
        %v514 = vsub.s32 %v511, %v513
        %v515 = vrot.slane %v501, %v514
        %v516 = vcombine.high %v508, 0.0
        %v518 = vunpack.c.l.s4 1934713408
        %v519 = vunpack.c.0.s8 %v518
        %v520 = vlaneseq
        %v521 = vshrl.u32 %v520, 7
        %v522 = vsub.s32 %v519, %v521
        %v523 = vrot.slane %v508, %v522
        %v525 = vunpack.c.l.s4 1934713408
        %v526 = vunpack.c.0.s8 %v525
        %v527 = vlaneseq
        %v528 = vshrl.u32 %v527, 7
        %v529 = vsub.s32 %v526, %v528
        %v530 = vrot.slane %v516, %v529
        %v531 = vcombine.high %v515, 0.0
        %v533 = vunpack.c.l.s4 1934713408
        %v534 = vunpack.c.0.s8 %v533
        %v535 = vlaneseq
        %v536 = vshrl.u32 %v535, 7
        %v537 = vsub.s32 %v534, %v536
        %v538 = vrot.slane %v515, %v537
        %v540 = vunpack.c.l.s4 1934713408
        %v541 = vunpack.c.0.s8 %v540
        %v542 = vlaneseq
        %v543 = vshrl.u32 %v542, 7
        %v544 = vsub.s32 %v541, %v543
        %v545 = vrot.slane %v531, %v544
        %v546 = vcombine.high %v523, 0.0
        %v547 = vcombine.high %v530, 0.0
        %v548 = vcombine.high %v538, 0.0
        %v549 = vcombine.high %v545, 0.0
        %551 = vrot.lane.b32.xlu0 %v546, 4
        %v552 = vpop.permute.xlu0 %551
        %555 = vrot.lane.b32.xlu0 %v530, 8
        %v556 = vpop.permute.xlu0 %555
        %559 = vrot.lane.b32.xlu0 %v547, 12
        %v560 = vpop.permute.xlu0 %559
        %563 = vrot.lane.b32.xlu0 %v538, 16
        %v564 = vpop.permute.xlu0 %563
        %567 = vrot.lane.b32.xlu0 %v548, 20
        %v568 = vpop.permute.xlu0 %567
        %571 = vrot.lane.b32.xlu0 %v545, 24
        %v572 = vpop.permute.xlu0 %571
        %575 = vrot.lane.b32.xlu0 %v549, 28
        %v576 = vpop.permute.xlu0 %575
        %v578 = vsel %vm210, %v523, %v552
        %v579 = vsel %vm212, %v578, %v556
        %v580 = vsel %vm214, %v579, %v560
        %v581 = vsel %vm216, %v580, %v564
        %v582 = vsel %vm218, %v581, %v568
        %v583 = vsel %vm220, %v582, %v572
        %v584 = vsel %vm222, %v583, %v576
        %585 = vst.msk [vmem:[%s131 + $0x4] sm:$0x1] %vm224, %v584
        %v586 = vld [vmem:[%s113] sm:$0xff]
        %588 = vrot.lane.b32.xlu0 %v586, 108
        %v589 = vpop.permute.xlu0 %588
        %v591 = vcombine.high %v589, 0.0
        %v593 = vunpack.c.l.s4 1983009808
        %v594 = vunpack.c.0.s8 %v593
        %v595 = vlaneseq
        %v596 = vshrl.u32 %v595, 7
        %v597 = vsub.s32 %v594, %v596
        %v598 = vrot.slane %v589, %v597
        %v600 = vunpack.c.l.s4 1983009808
        %v601 = vunpack.c.0.s8 %v600
        %v602 = vlaneseq
        %v603 = vshrl.u32 %v602, 7
        %v604 = vsub.s32 %v601, %v603
        %v605 = vrot.slane %v591, %v604
        %v606 = vcombine.high %v598, 0.0
        %v608 = vunpack.c.l.s4 1934713408
        %v609 = vunpack.c.0.s8 %v608
        %v610 = vlaneseq
        %v611 = vshrl.u32 %v610, 7
        %v612 = vsub.s32 %v609, %v611
        %v613 = vrot.slane %v598, %v612
        %v615 = vunpack.c.l.s4 1934713408
        %v616 = vunpack.c.0.s8 %v615
        %v617 = vlaneseq
        %v618 = vshrl.u32 %v617, 7
        %v619 = vsub.s32 %v616, %v618
        %v620 = vrot.slane %v606, %v619
        %v621 = vcombine.high %v605, 0.0
        %v623 = vunpack.c.l.s4 1934713408
        %v624 = vunpack.c.0.s8 %v623
        %v625 = vlaneseq
        %v626 = vshrl.u32 %v625, 7
        %v627 = vsub.s32 %v624, %v626
        %v628 = vrot.slane %v605, %v627
        %v630 = vunpack.c.l.s4 1934713408
        %v631 = vunpack.c.0.s8 %v630
        %v632 = vlaneseq
        %v633 = vshrl.u32 %v632, 7
        %v634 = vsub.s32 %v631, %v633
        %v635 = vrot.slane %v621, %v634
        %v636 = vcombine.high %v613, 0.0
        %v637 = vcombine.high %v620, 0.0
        %v638 = vcombine.high %v628, 0.0
        %v639 = vcombine.high %v635, 0.0
        %641 = vrot.lane.b32.xlu0 %v636, 4
        %v642 = vpop.permute.xlu0 %641
        %645 = vrot.lane.b32.xlu0 %v620, 8
        %v646 = vpop.permute.xlu0 %645
        %649 = vrot.lane.b32.xlu0 %v637, 12
        %v650 = vpop.permute.xlu0 %649
        %653 = vrot.lane.b32.xlu0 %v628, 16
        %v654 = vpop.permute.xlu0 %653
        %657 = vrot.lane.b32.xlu0 %v638, 20
        %v658 = vpop.permute.xlu0 %657
        %661 = vrot.lane.b32.xlu0 %v635, 24
        %v662 = vpop.permute.xlu0 %661
        %665 = vrot.lane.b32.xlu0 %v639, 28
        %v666 = vpop.permute.xlu0 %665
        %v668 = vsel %vm210, %v613, %v642
        %v669 = vsel %vm212, %v668, %v646
        %v670 = vsel %vm214, %v669, %v650
        %v671 = vsel %vm216, %v670, %v654
        %v672 = vsel %vm218, %v671, %v658
        %v673 = vsel %vm220, %v672, %v662
        %v674 = vsel %vm222, %v673, %v666
        %675 = vst.msk [vmem:[%s131 + $0x5] sm:$0x1] %vm224, %v674
        %v676 = vld [vmem:[%s113] sm:$0xff]
        %678 = vrot.lane.b32.xlu0 %v676, 104
        %v679 = vpop.permute.xlu0 %678
        %v681 = vcombine.high %v679, 0.0
        %v683 = vunpack.c.l.s4 1983009808
        %v684 = vunpack.c.0.s8 %v683
        %v685 = vlaneseq
        %v686 = vshrl.u32 %v685, 7
        %v687 = vsub.s32 %v684, %v686
        %v688 = vrot.slane %v679, %v687
        %v690 = vunpack.c.l.s4 1983009808
        %v691 = vunpack.c.0.s8 %v690
        %v692 = vlaneseq
        %v693 = vshrl.u32 %v692, 7
        %v694 = vsub.s32 %v691, %v693
        %v695 = vrot.slane %v681, %v694
        %v696 = vcombine.high %v688, 0.0
        %v698 = vunpack.c.l.s4 1934713408
        %v699 = vunpack.c.0.s8 %v698
        %v700 = vlaneseq
        %v701 = vshrl.u32 %v700, 7
        %v702 = vsub.s32 %v699, %v701
        %v703 = vrot.slane %v688, %v702
        %v705 = vunpack.c.l.s4 1934713408
        %v706 = vunpack.c.0.s8 %v705
        %v707 = vlaneseq
        %v708 = vshrl.u32 %v707, 7
        %v709 = vsub.s32 %v706, %v708
        %v710 = vrot.slane %v696, %v709
        %v711 = vcombine.high %v695, 0.0
        %v713 = vunpack.c.l.s4 1934713408
        %v714 = vunpack.c.0.s8 %v713
        %v715 = vlaneseq
        %v716 = vshrl.u32 %v715, 7
        %v717 = vsub.s32 %v714, %v716
        %v718 = vrot.slane %v695, %v717
        %v720 = vunpack.c.l.s4 1934713408
        %v721 = vunpack.c.0.s8 %v720
        %v722 = vlaneseq
        %v723 = vshrl.u32 %v722, 7
        %v724 = vsub.s32 %v721, %v723
        %v725 = vrot.slane %v711, %v724
        %v726 = vcombine.high %v703, 0.0
        %v727 = vcombine.high %v710, 0.0
        %v728 = vcombine.high %v718, 0.0
        %v729 = vcombine.high %v725, 0.0
        %731 = vrot.lane.b32.xlu0 %v726, 4
        %v732 = vpop.permute.xlu0 %731
        %735 = vrot.lane.b32.xlu0 %v710, 8
        %v736 = vpop.permute.xlu0 %735
        %739 = vrot.lane.b32.xlu0 %v727, 12
        %v740 = vpop.permute.xlu0 %739
        %743 = vrot.lane.b32.xlu0 %v718, 16
        %v744 = vpop.permute.xlu0 %743
        %747 = vrot.lane.b32.xlu0 %v728, 20
        %v748 = vpop.permute.xlu0 %747
        %751 = vrot.lane.b32.xlu0 %v725, 24
        %v752 = vpop.permute.xlu0 %751
        %755 = vrot.lane.b32.xlu0 %v729, 28
        %v756 = vpop.permute.xlu0 %755
        %v758 = vsel %vm210, %v703, %v732
        %v759 = vsel %vm212, %v758, %v736
        %v760 = vsel %vm214, %v759, %v740
        %v761 = vsel %vm216, %v760, %v744
        %v762 = vsel %vm218, %v761, %v748
        %v763 = vsel %vm220, %v762, %v752
        %v764 = vsel %vm222, %v763, %v756
        %765 = vst.msk [vmem:[%s131 + $0x6] sm:$0x1] %vm224, %v764
        %v766 = vld [vmem:[%s113] sm:$0xff]
        %768 = vrot.lane.b32.xlu0 %v766, 100
        %v769 = vpop.permute.xlu0 %768
        %v771 = vcombine.high %v769, 0.0
        %v773 = vunpack.c.l.s4 1983009808
        %v774 = vunpack.c.0.s8 %v773
        %v775 = vlaneseq
        %v776 = vshrl.u32 %v775, 7
        %v777 = vsub.s32 %v774, %v776
        %v778 = vrot.slane %v769, %v777
        %v780 = vunpack.c.l.s4 1983009808
        %v781 = vunpack.c.0.s8 %v780
        %v782 = vlaneseq
        %v783 = vshrl.u32 %v782, 7
        %v784 = vsub.s32 %v781, %v783
        %v785 = vrot.slane %v771, %v784
        %v786 = vcombine.high %v778, 0.0
        %v788 = vunpack.c.l.s4 1934713408
        %v789 = vunpack.c.0.s8 %v788
        %v790 = vlaneseq
        %v791 = vshrl.u32 %v790, 7
        %v792 = vsub.s32 %v789, %v791
        %v793 = vrot.slane %v778, %v792
        %v795 = vunpack.c.l.s4 1934713408
        %v796 = vunpack.c.0.s8 %v795
        %v797 = vlaneseq
        %v798 = vshrl.u32 %v797, 7
        %v799 = vsub.s32 %v796, %v798
        %v800 = vrot.slane %v786, %v799
        %v801 = vcombine.high %v785, 0.0
        %v803 = vunpack.c.l.s4 1934713408
        %v804 = vunpack.c.0.s8 %v803
        %v805 = vlaneseq
        %v806 = vshrl.u32 %v805, 7
        %v807 = vsub.s32 %v804, %v806
        %v808 = vrot.slane %v785, %v807
        %v810 = vunpack.c.l.s4 1934713408
        %v811 = vunpack.c.0.s8 %v810
        %v812 = vlaneseq
        %v813 = vshrl.u32 %v812, 7
        %v814 = vsub.s32 %v811, %v813
        %v815 = vrot.slane %v801, %v814
        %v816 = vcombine.high %v793, 0.0
        %v817 = vcombine.high %v800, 0.0
        %v818 = vcombine.high %v808, 0.0
        %v819 = vcombine.high %v815, 0.0
        %821 = vrot.lane.b32.xlu0 %v816, 4
        %v822 = vpop.permute.xlu0 %821
        %825 = vrot.lane.b32.xlu0 %v800, 8
        %v826 = vpop.permute.xlu0 %825
        %829 = vrot.lane.b32.xlu0 %v817, 12
        %v830 = vpop.permute.xlu0 %829
        %833 = vrot.lane.b32.xlu0 %v808, 16
        %v834 = vpop.permute.xlu0 %833
        %837 = vrot.lane.b32.xlu0 %v818, 20
        %v838 = vpop.permute.xlu0 %837
        %841 = vrot.lane.b32.xlu0 %v815, 24
        %v842 = vpop.permute.xlu0 %841
        %845 = vrot.lane.b32.xlu0 %v819, 28
        %v846 = vpop.permute.xlu0 %845
        %v848 = vsel %vm210, %v793, %v822
        %v849 = vsel %vm212, %v848, %v826
        %v850 = vsel %vm214, %v849, %v830
        %v851 = vsel %vm216, %v850, %v834
        %v852 = vsel %vm218, %v851, %v838
        %v853 = vsel %vm220, %v852, %v842
        %v854 = vsel %vm222, %v853, %v846
        %855 = vst.msk [vmem:[%s131 + $0x7] sm:$0x1] %vm224, %v854
        %s856 = sand.u32 %s52, 1
        %s857 = scalar_lea.sflag [#allocation4], %s856
        %s858 = sand.u32 %s52, 1
        %s859 = smul.addr %s858, 8
        %s860 = scalar_lea.vmem [#allocation5], %s859
        // Predicated region
        $region29: #{tpu_custom_call.1} parent=23 // pred_check
          %p861 = pneg %p62
        $region30: #{tpu_custom_call.1} parent=23 // pred_check_branch
          %863 = sbr.rel (%p861) target = $region32
        $region31: #{tpu_custom_call.1} parent=23 // pred_region
          %s865 = ssub.s32 128, 128
          %866 = vsyncadd %s857, %s865
          %s867 = smul.addr %s18, 128
          %s868 = scalar_lea.hbm %s1, %s867
          %s870 = sshll.u32 %s860, 4
          %s871 = int_to_ptr.vmem [resolvable:$true] %s870
          %873 = dma.vmem_to_hbm [thread:$0]  %s871, 128, %s868, %s857
        $region32: #{tpu_custom_call.1} parent=23 // pred_fallthru
          _
      $region24: #{tpu_custom_call.1} parent=5 // pred_fallthru
        _
      %p874 = scmp.le.s32.totalorder 2, %s13
      // Predicated region
      $region33: #{tpu_custom_call.1} parent=5 // pred_check
        %p875 = pneg %p874
      $region34: #{tpu_custom_call.1} parent=5 // pred_check_branch
        %877 = sbr.rel (%p875) target = $region36
      $region35: #{tpu_custom_call.1} parent=5 // pred_region
        %s878 = ssub.s32 %s13, 2
        // Predicated region
        $region37: #{tpu_custom_call.1} parent=35 // pred_check
          %p879 = pneg %p68
        $region38: #{tpu_custom_call.1} parent=35 // pred_check_branch
          %881 = sbr.rel (%p879) target = $region40
        $region39: #{tpu_custom_call.1} parent=35 // pred_region
          %s882 = sand.u32 %s53, 1
          %s883 = scalar_lea.sflag [#allocation4], %s882
          %s884 = sand.u32 %s53, 1
          %s885 = smul.addr %s884, 8
          %s886 = scalar_lea.vmem [#allocation5], %s885
          %887 = dma.done %s883, 128
        $region40: #{tpu_custom_call.1} parent=35 // pred_fallthru
          _
      $region36: #{tpu_custom_call.1} parent=5 // pred_fallthru
        _
    $region6: #{tpu_custom_call.1} parent=1 // loop_footer
      %s17 = sadd.s32 1, %s13
    $region7: #{tpu_custom_call.1} parent=1 // loop_footer_branch
      %12 = sbr.rel target = $region3
    $region8: #{tpu_custom_call.1} parent=1 // loop_exit
      _
    %888 = vsyncpa [#allocation3], 1
    %s889 = scalar_lea.sflag [#allocation3], 1
    %890 = vsyncpa %s889, 1
    %891 = vsyncpa [#allocation4], 1
    %s892 = scalar_lea.sflag [#allocation4], 1
    %893 = vsyncpa %s892, 1

</llo_original>
